<compile_context>
chip_gen: v7x
topology: tpu7x:2x2x1
jax: 0.10.0
libtpu: 0.0.40
codegen_flags: <defaults>
</compile_context>

<pallas_src>
import functools

import jax
import jax.numpy as jnp
from jax.experimental import pallas as pl
from jax.experimental.pallas import tpu as pltpu

HIDDEN = 128
OBS_DIM = 4
ACT_DIM = 2
W3_PAD = 128  # fc3 weights zero-padded to 128 output lanes for a clean MXU pass


def _round_up(n, m):
    return ((n + m - 1) // m) * m


def _cdiv(a, b):
    return -(-a // b)


def qnet_kernel(x_ref, w1_ref, b1_ref, w2_ref, b2_ref, w3_ref, b3_ref, o_ref):
    # x: (TB, 4) f32; w1/b1 f32; w2/w3 bf16; b2/b3 f32; out: (TB, 2) f32.
    x = x_ref[...]          # (TB, 4) f32
    w1 = w1_ref[...]        # (4, 128) f32

    # Layer 1: K=4 contraction as 4 VPU broadcast multiply-adds (skip the MXU).
    h1 = b1_ref[...] + x[:, 0:1] * w1[0:1, :]
    for k in range(1, OBS_DIM):
        h1 = h1 + x[:, k:k + 1] * w1[k:k + 1, :]
    h1 = jnp.maximum(h1, 0.0)                                   # f32 ReLU

    # Layer 2: bf16 MXU matmul, f32 accumulation, f32 epilogue.
    h2 = jnp.dot(h1.astype(jnp.bfloat16), w2_ref[...],
                 preferred_element_type=jnp.float32) + b2_ref[...]
    h2 = jnp.maximum(h2, 0.0)

    # Layer 3: 128-lane padded matmul on the MXU, but only the 2 real action
    # columns are stored (out block is (TB, 2)) -> ~8 B/row HBM writeback.
    out = jnp.dot(h2.astype(jnp.bfloat16), w3_ref[...],
                  preferred_element_type=jnp.float32) + b3_ref[...]
    o_ref[...] = out[:, :ACT_DIM].astype(o_ref.dtype)


def _choose_tile(B, tile_b):
    """Batch tile: >=2 grid steps when B > 8 (v7x megacore), 128-aligned when big."""
    if B <= 8:
        return 8
    n_steps = max(2, _cdiv(B, tile_b))
    per = _cdiv(B, n_steps)
    gran = 128 if per >= 128 else 8   # keep M a multiple of 128 on the hot path
    return _round_up(per, gran)


@functools.partial(jax.jit, static_argnames=("tile_b",))
def qnet_forward(x, kernel_params, *, tile_b=2048):
    """x: (B, 4) f32. kernel_params from prepare_params(). Returns (B, 2) f32."""
    w1, b1, w2, b2, w3p, b3p = kernel_params
    B = x.shape[0]

    tb = _choose_tile(B, tile_b)
    B_pad = _round_up(B, tb)
    if B_pad != B:
        x = jnp.pad(x, ((0, B_pad - B), (0, 0)))
    grid = (B_pad // tb,)

    const = lambda shape: pl.BlockSpec(shape, lambda i: (0,) * len(shape))

    flops = 2 * B_pad * (OBS_DIM * HIDDEN + HIDDEN * HIDDEN + HIDDEN * W3_PAD)
    bytes_accessed = (B_pad * OBS_DIM * 4                 # x read
                      + w1.size * 4 + b1.size * 4
                      + w2.size * 2 + b2.size * 4
                      + w3p.size * 2 + b3p.size * 4
                      + B_pad * ACT_DIM * 4)              # 2-lane output write

    out = pl.pallas_call(
        qnet_kernel,
        out_shape=jax.ShapeDtypeStruct((B_pad, ACT_DIM), jnp.float32),
        grid=grid,
        in_specs=[
            pl.BlockSpec((tb, OBS_DIM), lambda i: (i, 0)),   # x: tiled over batch
            const(w1.shape), const(b1.shape),                # weights stay resident
            const(w2.shape), const(b2.shape),
            const(w3p.shape), const(b3p.shape),
        ],
        out_specs=pl.BlockSpec((tb, ACT_DIM), lambda i: (i, 0)),
        compiler_params=pltpu.CompilerParams(
            dimension_semantics=("parallel",)),              # megacore on v7x
        cost_estimate=pl.CostEstimate(
            flops=flops, transcendentals=0, bytes_accessed=bytes_accessed),
    )(x, w1, b1, w2, b2, w3p, b3p)

    return out if B_pad == B else out[:B]


def init_params(key):
    """f32 master params mimicking PyTorch nn.Linear default init, stored [in, out]."""
    dims = [(OBS_DIM, HIDDEN), (HIDDEN, HIDDEN), (HIDDEN, ACT_DIM)]
    params = []
    for fan_in, fan_out in dims:
        kw, kb, key = jax.random.split(key, 3)
        bound = 1.0 / jnp.sqrt(jnp.float32(fan_in))
        w = jax.random.uniform(kw, (fan_in, fan_out), jnp.float32, -bound, bound)
        b = jax.random.uniform(kb, (1, fan_out), jnp.float32, -bound, bound)
        params.extend([w, b])
    return tuple(params)


def prepare_params(params_f32):
    """Cast MXU-bound weights to bf16 and zero-pad fc3 to 128 output lanes."""
    w1, b1, w2, b2, w3, b3 = params_f32
    w3p = jnp.zeros((HIDDEN, W3_PAD), jnp.float32).at[:, :ACT_DIM].set(w3)
    b3p = jnp.zeros((1, W3_PAD), jnp.float32).at[:, :ACT_DIM].set(b3)
    return (w1, b1,
            w2.astype(jnp.bfloat16), b2,
            w3p.astype(jnp.bfloat16), b3p)


def reference_forward_exact(x, params_f32):
    """Pure-f32 PyTorch-equivalent forward."""
    w1, b1, w2, b2, w3, b3 = params_f32
    h1 = jnp.maximum(x @ w1 + b1, 0.0)
    h2 = jnp.maximum(h1 @ w2 + b2, 0.0)
    return h2 @ w3 + b3


def reference_forward_matched(x, kernel_params):
    """Reference that applies the same bf16 rounding as the kernel (f32 accumulate)."""
    w1, b1, w2, b2, w3p, b3p = kernel_params
    h1 = jnp.maximum(x @ w1 + b1, 0.0)
    h2 = h1.astype(jnp.bfloat16).astype(jnp.float32) @ w2.astype(jnp.float32) + b2
    h2 = jnp.maximum(h2, 0.0)
    out = h2.astype(jnp.bfloat16).astype(jnp.float32) @ w3p.astype(jnp.float32) + b3p
    return out[:, :ACT_DIM]


if __name__ == "__main__":
    key = jax.random.PRNGKey(0)
    kx1, kx2, kx3, kp = jax.random.split(key, 4)

    params = init_params(kp)
    kparams = prepare_params(params)

    ok = True
    # Small per-step batch (CartPole-style obs, dim 4), a non-aligned medium
    # batch (exercises gran=8 tiles + padding), and a multi-tile batch
    # (exercises 128-aligned tiles + grid > 1).
    for kx, B in ((kx1, 8), (kx2, 100), (kx3, 384)):
        x = jax.random.normal(kx, (B, OBS_DIM), jnp.float32)

        out = jax.block_until_ready(qnet_forward(x, kparams))
        assert out.shape == (B, ACT_DIM), out.shape

        ref_match = reference_forward_matched(x, kparams)
        ref_exact = reference_forward_exact(x, params)
        ok &= bool(jnp.allclose(out, ref_match, atol=2e-3, rtol=2e-3))
        ok &= bool(jnp.allclose(out, ref_exact, atol=5e-2, rtol=5e-2))

    assert ok, "mismatch vs reference"
    print("KERNEL_OK")
</pallas_src>

<mosaic_0001>
module attributes {stable_mosaic.version = 11 : i64} {
  func.func @qnet_kernel(%arg0: i32, %arg1: memref<8x4xf32, #tpu.memory_space<vmem>>, %arg2: memref<4x128xf32, #tpu.memory_space<vmem>>, %arg3: memref<1x128xf32, #tpu.memory_space<vmem>>, %arg4: memref<128x128xbf16, #tpu.memory_space<vmem>>, %arg5: memref<1x128xf32, #tpu.memory_space<vmem>>, %arg6: memref<128x128xbf16, #tpu.memory_space<vmem>>, %arg7: memref<1x128xf32, #tpu.memory_space<vmem>>, %arg8: memref<8x2xf32, #tpu.memory_space<vmem>>) attributes {dimension_semantics = [#tpu.dimension_semantics<parallel>], iteration_bounds = array<i64: 1>, scalar_prefetch = 0 : i64, scratch_operands = 0 : i64, tpu.core_type = #tpu.core_type<tc>, window_params = [{transform_indices = @transform_0, window_bounds = array<i64: 8, 4>}, {pipeline_mode = #tpu.pipeline_mode<synchronous>, transform_indices = @transform_1, window_bounds = array<i64: 4, 128>}, {pipeline_mode = #tpu.pipeline_mode<synchronous>, transform_indices = @transform_2, window_bounds = array<i64: 1, 128>}, {pipeline_mode = #tpu.pipeline_mode<synchronous>, transform_indices = @transform_3, window_bounds = array<i64: 128, 128>}, {pipeline_mode = #tpu.pipeline_mode<synchronous>, transform_indices = @transform_4, window_bounds = array<i64: 1, 128>}, {pipeline_mode = #tpu.pipeline_mode<synchronous>, transform_indices = @transform_5, window_bounds = array<i64: 128, 128>}, {pipeline_mode = #tpu.pipeline_mode<synchronous>, transform_indices = @transform_6, window_bounds = array<i64: 1, 128>}, {transform_indices = @transform_7, window_bounds = array<i64: 8, 2>}]} {
    %c0 = arith.constant 0 : index
    %c0_0 = arith.constant 0 : index
    %0 = vector.load %arg1[%c0, %c0_0] : memref<8x4xf32, #tpu.memory_space<vmem>>, vector<8x4xf32>
    %c0_1 = arith.constant 0 : index
    %c0_2 = arith.constant 0 : index
    %1 = vector.load %arg2[%c0_1, %c0_2] : memref<4x128xf32, #tpu.memory_space<vmem>>, vector<4x128xf32>
    %c0_3 = arith.constant 0 : index
    %c0_4 = arith.constant 0 : index
    %2 = vector.load %arg3[%c0_3, %c0_4] : memref<1x128xf32, #tpu.memory_space<vmem>>, vector<1x128xf32>
    %3 = vector.extract_strided_slice %0 {offsets = [0, 0], sizes = [8, 1], strides = [1, 1]} : vector<8x4xf32> to vector<8x1xf32>
    %4 = vector.extract_strided_slice %1 {offsets = [0, 0], sizes = [1, 128], strides = [1, 1]} : vector<4x128xf32> to vector<1x128xf32>
    %5 = vector.broadcast %3 : vector<8x1xf32> to vector<8x128xf32>
    %6 = vector.broadcast %4 : vector<1x128xf32> to vector<8x128xf32>
    %7 = arith.mulf %5, %6 : vector<8x128xf32>
    %8 = vector.broadcast %2 : vector<1x128xf32> to vector<8x128xf32>
    %9 = arith.addf %8, %7 : vector<8x128xf32>
    %10 = vector.extract_strided_slice %0 {offsets = [0, 1], sizes = [8, 1], strides = [1, 1]} : vector<8x4xf32> to vector<8x1xf32>
    %11 = vector.extract_strided_slice %1 {offsets = [1, 0], sizes = [1, 128], strides = [1, 1]} : vector<4x128xf32> to vector<1x128xf32>
    %12 = vector.broadcast %10 : vector<8x1xf32> to vector<8x128xf32>
    %13 = vector.broadcast %11 : vector<1x128xf32> to vector<8x128xf32>
    %14 = arith.mulf %12, %13 : vector<8x128xf32>
    %15 = arith.addf %9, %14 : vector<8x128xf32>
    %16 = vector.extract_strided_slice %0 {offsets = [0, 2], sizes = [8, 1], strides = [1, 1]} : vector<8x4xf32> to vector<8x1xf32>
    %17 = vector.extract_strided_slice %1 {offsets = [2, 0], sizes = [1, 128], strides = [1, 1]} : vector<4x128xf32> to vector<1x128xf32>
    %18 = vector.broadcast %16 : vector<8x1xf32> to vector<8x128xf32>
    %19 = vector.broadcast %17 : vector<1x128xf32> to vector<8x128xf32>
    %20 = arith.mulf %18, %19 : vector<8x128xf32>
    %21 = arith.addf %15, %20 : vector<8x128xf32>
    %22 = vector.extract_strided_slice %0 {offsets = [0, 3], sizes = [8, 1], strides = [1, 1]} : vector<8x4xf32> to vector<8x1xf32>
    %23 = vector.extract_strided_slice %1 {offsets = [3, 0], sizes = [1, 128], strides = [1, 1]} : vector<4x128xf32> to vector<1x128xf32>
    %24 = vector.broadcast %22 : vector<8x1xf32> to vector<8x128xf32>
    %25 = vector.broadcast %23 : vector<1x128xf32> to vector<8x128xf32>
    %26 = arith.mulf %24, %25 : vector<8x128xf32>
    %27 = arith.addf %21, %26 : vector<8x128xf32>
    %cst = arith.constant 0.000000e+00 : f32
    %28 = vector.broadcast %cst : f32 to vector<8x128xf32>
    %29 = arith.maximumf %27, %28 : vector<8x128xf32>
    %30 = arith.truncf %29 : vector<8x128xf32> to vector<8x128xbf16>
    %c0_5 = arith.constant 0 : index
    %c0_6 = arith.constant 0 : index
    %31 = vector.load %arg4[%c0_5, %c0_6] : memref<128x128xbf16, #tpu.memory_space<vmem>>, vector<128x128xbf16>
    %cst_7 = arith.constant dense<0.000000e+00> : vector<8x128xf32>
    %32 = tpu.matmul %30, %31, %cst_7 {dimension_numbers = #tpu.dot_dimension_numbers<[1], [0], [0], [1], [0, 0, 1, 1], [], []>} : vector<8x128xbf16>, vector<128x128xbf16>, vector<8x128xf32> -> vector<8x128xf32>
    %c0_8 = arith.constant 0 : index
    %c0_9 = arith.constant 0 : index
    %33 = vector.load %arg5[%c0_8, %c0_9] : memref<1x128xf32, #tpu.memory_space<vmem>>, vector<1x128xf32>
    %34 = vector.broadcast %33 : vector<1x128xf32> to vector<8x128xf32>
    %35 = arith.addf %32, %34 : vector<8x128xf32>
    %cst_10 = arith.constant 0.000000e+00 : f32
    %36 = vector.broadcast %cst_10 : f32 to vector<8x128xf32>
    %37 = arith.maximumf %35, %36 : vector<8x128xf32>
    %38 = arith.truncf %37 : vector<8x128xf32> to vector<8x128xbf16>
    %c0_11 = arith.constant 0 : index
    %c0_12 = arith.constant 0 : index
    %39 = vector.load %arg6[%c0_11, %c0_12] : memref<128x128xbf16, #tpu.memory_space<vmem>>, vector<128x128xbf16>
    %cst_13 = arith.constant dense<0.000000e+00> : vector<8x128xf32>
    %40 = tpu.matmul %38, %39, %cst_13 {dimension_numbers = #tpu.dot_dimension_numbers<[1], [0], [0], [1], [0, 0, 1, 1], [], []>} : vector<8x128xbf16>, vector<128x128xbf16>, vector<8x128xf32> -> vector<8x128xf32>
    %c0_14 = arith.constant 0 : index
    %c0_15 = arith.constant 0 : index
    %41 = vector.load %arg7[%c0_14, %c0_15] : memref<1x128xf32, #tpu.memory_space<vmem>>, vector<1x128xf32>
    %42 = vector.broadcast %41 : vector<1x128xf32> to vector<8x128xf32>
    %43 = arith.addf %40, %42 : vector<8x128xf32>
    %44 = vector.extract_strided_slice %43 {offsets = [0, 0], sizes = [8, 2], strides = [1, 1]} : vector<8x128xf32> to vector<8x2xf32>
    %c0_16 = arith.constant 0 : index
    %c0_17 = arith.constant 0 : index
    %45 = vector.load %arg8[%c0_16, %c0_17] : memref<8x2xf32, #tpu.memory_space<vmem>>, vector<8x2xf32>
    tpu.vector_store %arg8[%c0_16, %c0_17], %44 {strides = array<i32>} : memref<8x2xf32, #tpu.memory_space<vmem>>, vector<8x2xf32>,
    return
  }
  func.func @transform_0(%arg0: i32) -> (i32, i32) {
    %c0_i32 = arith.constant 0 : i32
    %c0_i32_0 = arith.constant 0 : i32
    return %arg0, %c0_i32 : i32, i32
  }
  func.func @transform_1(%arg0: i32) -> (i32, i32) {
    %c0_i32 = arith.constant 0 : i32
    %c0_i32_0 = arith.constant 0 : i32
    %c0_i32_1 = arith.constant 0 : i32
    return %c0_i32, %c0_i32_0 : i32, i32
  }
  func.func @transform_2(%arg0: i32) -> (i32, i32) {
    %c0_i32 = arith.constant 0 : i32
    %c0_i32_0 = arith.constant 0 : i32
    %c0_i32_1 = arith.constant 0 : i32
    return %c0_i32, %c0_i32_0 : i32, i32
  }
  func.func @transform_3(%arg0: i32) -> (i32, i32) {
    %c0_i32 = arith.constant 0 : i32
    %c0_i32_0 = arith.constant 0 : i32
    %c0_i32_1 = arith.constant 0 : i32
    return %c0_i32, %c0_i32_0 : i32, i32
  }
  func.func @transform_4(%arg0: i32) -> (i32, i32) {
    %c0_i32 = arith.constant 0 : i32
    %c0_i32_0 = arith.constant 0 : i32
    %c0_i32_1 = arith.constant 0 : i32
    return %c0_i32, %c0_i32_0 : i32, i32
  }
  func.func @transform_5(%arg0: i32) -> (i32, i32) {
    %c0_i32 = arith.constant 0 : i32
    %c0_i32_0 = arith.constant 0 : i32
    %c0_i32_1 = arith.constant 0 : i32
    return %c0_i32, %c0_i32_0 : i32, i32
  }
  func.func @transform_6(%arg0: i32) -> (i32, i32) {
    %c0_i32 = arith.constant 0 : i32
    %c0_i32_0 = arith.constant 0 : i32
    %c0_i32_1 = arith.constant 0 : i32
    return %c0_i32, %c0_i32_0 : i32, i32
  }
  func.func @transform_7(%arg0: i32) -> (i32, i32) {
    %c0_i32 = arith.constant 0 : i32
    %c0_i32_0 = arith.constant 0 : i32
    return %arg0, %c0_i32 : i32, i32
  }
}

</mosaic_0001>

<llo_original>
// kernel: qnet_forward.1
$region0: #{qnet_forward.1}
  #allocation0 [shape = 'u32[]', space=smem, size = 0x4, offset = 0x4, fixed_abs, tag = 'smem constant byte address 0x4 - core index']
  #allocation1 [shape = 'u32[144,128]{1,0:T(1,128)}', space=vmem, size = 0x12000, scoped, tag = 'internal scratch']
  %s0 = inlined_call_operand.vmem [shape: f32[8,4], index: 0, kind: input, shape index: {}]
  %s1 = inlined_call_operand.vmem [shape: f32[4,128], index: 1, kind: input, shape index: {}]
  %s2 = inlined_call_operand.vmem [shape: f32[1,128], index: 2, kind: input, shape index: {}]
  %s3 = inlined_call_operand.hbm [shape: bf16[128,128], index: 3, kind: input, shape index: {}]
  %s4 = inlined_call_operand.vmem [shape: f32[1,128], index: 4, kind: input, shape index: {}]
  %s5 = inlined_call_operand.hbm [shape: bf16[128,128], index: 5, kind: input, shape index: {}]
  %s6 = inlined_call_operand.vmem [shape: f32[1,128], index: 6, kind: input, shape index: {}]
  %s7 = inlined_call_operand.vmem [shape: f32[8,2], index: 7, kind: output, shape index: {}]
  %s8 = sld [smem:[#allocation0]]
  $region46: #{qnet_forward.1} parent=0
    _
  %s10 = ssub.s32 1, %s8
  %s11 = scalar_select 0, %s10, %s8
  $region1: #{qnet_forward.1} parent=0
    #allocation2 [shape = 'u8[32768]{0}', space=vmem, size = 0x8000, scoped, tag = 'input window, operand 3, single buffered']
    #allocation3 [shape = 's32[1]{0}', space=sflag, size = 0x4, scoped, tag = 'scoped memory for qnet_forward.1']
    #allocation4 [shape = 'u8[32768]{0}', space=vmem, size = 0x8000, scoped, tag = 'input window, operand 5, single buffered']
    #allocation5 [shape = 's32[1]{0}', space=sflag, size = 0x4, scoped, tag = 'scoped memory for qnet_forward.1']
    %12 = vsyncpa [#allocation3], 0
    %13 = vsyncpa [#allocation5], 0
    // Predicated region
    $region2: #{qnet_forward.1} parent=1 // pred_check
      _
    $region3: #{qnet_forward.1} parent=1 // pred_check_branch
      %15 = sbr.rel (0) target = $region5
    $region4: #{qnet_forward.1} parent=1 // pred_region
      _
    $region5: #{qnet_forward.1} parent=1 // pred_fallthru
      _
    // Predicated region
    $region6: #{qnet_forward.1} parent=1 // pred_check
      _
    $region7: #{qnet_forward.1} parent=1 // pred_check_branch
      %17 = sbr.rel (0) target = $region9
    $region8: #{qnet_forward.1} parent=1 // pred_region
      _
    $region9: #{qnet_forward.1} parent=1 // pred_fallthru
      _
    // Predicated region
    $region10: #{qnet_forward.1} parent=1 // pred_check
      _
    $region11: #{qnet_forward.1} parent=1 // pred_check_branch
      %19 = sbr.rel (0) target = $region13
    $region12: #{qnet_forward.1} parent=1 // pred_region
      _
    $region13: #{qnet_forward.1} parent=1 // pred_fallthru
      _
    // Predicated region
    $region14: #{qnet_forward.1} parent=1 // pred_check
      _
    $region15: #{qnet_forward.1} parent=1 // pred_check_branch
      %21 = sbr.rel (0) target = $region17
    $region16: #{qnet_forward.1} parent=1 // pred_region
      %s23 = ssub.s32 1024, 1024
      %24 = vsyncadd [#allocation3], %s23
      %s25 = sshll.u32 [#allocation2], 4
      %s26 = int_to_ptr.vmem [resolvable:$true] %s25
      %31 = dma.hbm_to_vmem [thread:$0]  %s3, 1024, %s26, [#allocation3], 64, 64, 4
    $region17: #{qnet_forward.1} parent=1 // pred_fallthru
      _
    // Predicated region
    $region18: #{qnet_forward.1} parent=1 // pred_check
      _
    $region19: #{qnet_forward.1} parent=1 // pred_check_branch
      %33 = sbr.rel (0) target = $region21
    $region20: #{qnet_forward.1} parent=1 // pred_region
      _
    $region21: #{qnet_forward.1} parent=1 // pred_fallthru
      _
    // Predicated region
    $region22: #{qnet_forward.1} parent=1 // pred_check
      _
    $region23: #{qnet_forward.1} parent=1 // pred_check_branch
      %35 = sbr.rel (0) target = $region25
    $region24: #{qnet_forward.1} parent=1 // pred_region
      %s37 = ssub.s32 1024, 1024
      %38 = vsyncadd [#allocation5], %s37
      %s39 = sshll.u32 [#allocation4], 4
      %s40 = int_to_ptr.vmem [resolvable:$true] %s39
      %45 = dma.hbm_to_vmem [thread:$0]  %s5, 1024, %s40, [#allocation5], 64, 64, 4
    $region25: #{qnet_forward.1} parent=1 // pred_fallthru
      _
    // Predicated region
    $region26: #{qnet_forward.1} parent=1 // pred_check
      _
    $region27: #{qnet_forward.1} parent=1 // pred_check_branch
      %47 = sbr.rel (0) target = $region29
    $region28: #{qnet_forward.1} parent=1 // pred_region
      _
    $region29: #{qnet_forward.1} parent=1 // pred_fallthru
      _
    // Predicated region
    $region30: #{qnet_forward.1} parent=1 // pred_check
      _
    $region31: #{qnet_forward.1} parent=1 // pred_check_branch
      %49 = sbr.rel (0) target = $region33
    $region32: #{qnet_forward.1} parent=1 // pred_region
      %50 = dma.done [#allocation3], 1024
    $region33: #{qnet_forward.1} parent=1 // pred_fallthru
      _
    // Predicated region
    $region34: #{qnet_forward.1} parent=1 // pred_check
      _
    $region35: #{qnet_forward.1} parent=1 // pred_check_branch
      %52 = sbr.rel (0) target = $region37
    $region36: #{qnet_forward.1} parent=1 // pred_region
      %53 = dma.done [#allocation5], 1024
    $region37: #{qnet_forward.1} parent=1 // pred_fallthru
      _
    %v55 = vld [vmem:[%s0] sm:$0xff]
    %v56 = vld [vmem:[%s1] sm:$0xf]
    %v57 = vld [vmem:[%s2] sm:$0x1]
    %59 = vset.pattern.permute.xlu0 0
    %60 = vperm.xlu0 %59, %v55
    %v61 = vpop.permute.xlu0 %60
    %v63 = vlaneseq
    %v64 = vshrl.u32 %v63, 7
    %v65 = vsub.s32 0, %v64
    %v66 = vrot.slane %v56, %v65
    %v67 = vmul.f32 %v61, %v66
    %v69 = vlaneseq
    %v70 = vshrl.u32 %v69, 7
    %v71 = vsub.s32 0, %v70
    %v72 = vrot.slane %v57, %v71
    %v74 = vadd.f32 %v72, %v67
    %75 = vset.pattern.permute.xlu0 1
    %76 = vperm.xlu0 %75, %v55
    %v77 = vpop.permute.xlu0 %76
    %v79 = vlaneseq
    %v80 = vshrl.u32 %v79, 7
    %v81 = vsub.s32 1, %v80
    %v82 = vrot.slane %v56, %v81
    %v83 = vmul.f32 %v77, %v82
    %v84 = vadd.f32 %v74, %v83
    %85 = vset.pattern.permute.xlu0 2
    %86 = vperm.xlu0 %85, %v55
    %v87 = vpop.permute.xlu0 %86
    %v89 = vlaneseq
    %v90 = vshrl.u32 %v89, 7
    %v91 = vsub.s32 2, %v90
    %v92 = vrot.slane %v56, %v91
    %v93 = vmul.f32 %v87, %v92
    %v94 = vadd.f32 %v84, %v93
    %95 = vset.pattern.permute.xlu0 3
    %96 = vperm.xlu0 %95, %v55
    %v97 = vpop.permute.xlu0 %96
    %v99 = vlaneseq
    %v100 = vshrl.u32 %v99, 7
    %v101 = vsub.s32 3, %v100
    %v102 = vrot.slane %v56, %v101
    %v103 = vmul.f32 %v97, %v102
    %v104 = vadd.f32 %v94, %v103
    %v105 = vmax.f32 %v104, 0.0
    %v106 = vpack.c.bf16 %v105, %v105
    %v107 = vld [vmem:[#allocation2] sm:$0xf]
    %v108 = vld [vmem:[#allocation2 + $0x4] sm:$0xf]
    %v109 = vld [vmem:[#allocation2 + $0x8] sm:$0xf]
    %v110 = vld [vmem:[#allocation2 + $0xc] sm:$0xf]
    %v111 = vld [vmem:[#allocation2 + $0x10] sm:$0xf]
    %v112 = vld [vmem:[#allocation2 + $0x14] sm:$0xf]
    %v113 = vld [vmem:[#allocation2 + $0x18] sm:$0xf]
    %v114 = vld [vmem:[#allocation2 + $0x1c] sm:$0xf]
    %v115 = vld [vmem:[#allocation2 + $0x20] sm:$0xf]
    %v116 = vld [vmem:[#allocation2 + $0x24] sm:$0xf]
    %v117 = vld [vmem:[#allocation2 + $0x28] sm:$0xf]
    %v118 = vld [vmem:[#allocation2 + $0x2c] sm:$0xf]
    %v119 = vld [vmem:[#allocation2 + $0x30] sm:$0xf]
    %v120 = vld [vmem:[#allocation2 + $0x34] sm:$0xf]
    %v121 = vld [vmem:[#allocation2 + $0x38] sm:$0xf]
    %v122 = vld [vmem:[#allocation2 + $0x3c] sm:$0xf]
    %v123 = vld [vmem:[%s4] sm:$0x1]
    %v125 = vlaneseq
    %v126 = vshrl.u32 %v125, 7
    %v127 = vsub.s32 0, %v126
    %v128 = vrot.slane %v123, %v127
    %v146 = vunpack.c.l.b16 %v107
    %v147 = vunpack.c.l.b16 %v108
    %v148 = vunpack.c.l.b16 %v109
    %v149 = vunpack.c.l.b16 %v110
    %v150 = vunpack.c.l.b16 %v111
    %v151 = vunpack.c.l.b16 %v112
    %v152 = vunpack.c.l.b16 %v113
    %v153 = vunpack.c.l.b16 %v114
    %v154 = vunpack.c.l.b16 %v115
    %v155 = vunpack.c.l.b16 %v116
    %v156 = vunpack.c.l.b16 %v117
    %v157 = vunpack.c.l.b16 %v118
    %v158 = vunpack.c.l.b16 %v119
    %v159 = vunpack.c.l.b16 %v120
    %v160 = vunpack.c.l.b16 %v121
    %v161 = vunpack.c.l.b16 %v122
    %v162 = vpack.c.b16 %v147, %v146
    %v163 = vpack.c.b16 %v149, %v148
    %v164 = vpack.c.b16 %v151, %v150
    %v165 = vpack.c.b16 %v153, %v152
    %v166 = vpack.c.b16 %v155, %v154
    %v167 = vpack.c.b16 %v157, %v156
    %v168 = vpack.c.b16 %v159, %v158
    %v169 = vpack.c.b16 %v161, %v160
    %178 = vmatprep.subr.bf16.mxu0 0
    %179 = vmatpush1.bf16.msra.mxu0 %v162
    %180 = vmatprep.subr.bf16.mxu0 0
    %181 = vmatpush1.bf16.msra.mxu0 %v163
    %182 = vmatprep.subr.bf16.mxu0 0
    %183 = vmatpush1.bf16.msra.mxu0 %v164
    %184 = vmatprep.subr.bf16.mxu0 0
    %185 = vmatpush1.bf16.msra.mxu0 %v165
    %186 = vmatprep.subr.bf16.mxu0 0
    %187 = vmatpush1.bf16.msra.mxu0 %v166
    %188 = vmatprep.subr.bf16.mxu0 0
    %189 = vmatpush1.bf16.msra.mxu0 %v167
    %190 = vmatprep.subr.bf16.mxu0 0
    %191 = vmatpush1.bf16.msra.mxu0 %v168
    %192 = vmatprep.subr.bf16.mxu0 0
    %193 = vmatpush1.bf16.msra.mxu0 %v169
    %194 = vmatprep.subr.bf16.mxu0 0
    %195 = vmatpush1.bf16.msra.mxu0 0
    %196 = vmatprep.subr.bf16.mxu0 0
    %197 = vmatpush1.bf16.msra.mxu0 0
    %198 = vmatprep.subr.bf16.mxu0 0
    %199 = vmatpush1.bf16.msra.mxu0 0
    %200 = vmatprep.subr.bf16.mxu0 0
    %201 = vmatpush1.bf16.msra.mxu0 0
    %202 = vmatprep.subr.bf16.mxu0 0
    %203 = vmatpush1.bf16.msra.mxu0 0
    %204 = vmatprep.subr.bf16.mxu0 0
    %205 = vmatpush1.bf16.msra.mxu0 0
    %206 = vmatprep.subr.bf16.mxu0 0
    %207 = vmatpush1.bf16.msra.mxu0 0
    %208 = vmatprep.subr.bf16.mxu0 0
    %209 = vmatpush1.bf16.msra.mxu0 0
    %210 = vmatprep.mubr.bf16.mxu0 0
    %211 = vmatmul.mubr.bf16.gmra.mrb[0].mxu0 %v106
    %v212 = vpop.f32.mrb[0].mxu0
    %v213 = vadd.f32 %v128, %v212
    %v214 = vpop.f32.mrb[0].mxu0
    %v215 = vpop.f32.mrb[0].mxu0
    %v216 = vpop.f32.mrb[0].mxu0
    %217 = vdwg.mxu0
    %v218 = vmax.f32 %v213, 0.0
    %v219 = vpack.c.bf16 %v218, %v218
    %v220 = vld [vmem:[#allocation4] sm:$0xf]
    %v221 = vld [vmem:[#allocation4 + $0x4] sm:$0xf]
    %v222 = vld [vmem:[#allocation4 + $0x8] sm:$0xf]
    %v223 = vld [vmem:[#allocation4 + $0xc] sm:$0xf]
    %v224 = vld [vmem:[#allocation4 + $0x10] sm:$0xf]
    %v225 = vld [vmem:[#allocation4 + $0x14] sm:$0xf]
    %v226 = vld [vmem:[#allocation4 + $0x18] sm:$0xf]
    %v227 = vld [vmem:[#allocation4 + $0x1c] sm:$0xf]
    %v228 = vld [vmem:[#allocation4 + $0x20] sm:$0xf]
    %v229 = vld [vmem:[#allocation4 + $0x24] sm:$0xf]
    %v230 = vld [vmem:[#allocation4 + $0x28] sm:$0xf]
    %v231 = vld [vmem:[#allocation4 + $0x2c] sm:$0xf]
    %v232 = vld [vmem:[#allocation4 + $0x30] sm:$0xf]
    %v233 = vld [vmem:[#allocation4 + $0x34] sm:$0xf]
    %v234 = vld [vmem:[#allocation4 + $0x38] sm:$0xf]
    %v235 = vld [vmem:[#allocation4 + $0x3c] sm:$0xf]
    %v236 = vld [vmem:[%s6] sm:$0x1]
    %v238 = vlaneseq
    %v239 = vshrl.u32 %v238, 7
    %v240 = vsub.s32 0, %v239
    %v241 = vrot.slane %v236, %v240
    %v259 = vunpack.c.l.b16 %v220
    %v260 = vunpack.c.l.b16 %v221
    %v261 = vunpack.c.l.b16 %v222
    %v262 = vunpack.c.l.b16 %v223
    %v263 = vunpack.c.l.b16 %v224
    %v264 = vunpack.c.l.b16 %v225
    %v265 = vunpack.c.l.b16 %v226
    %v266 = vunpack.c.l.b16 %v227
    %v267 = vunpack.c.l.b16 %v228
    %v268 = vunpack.c.l.b16 %v229
    %v269 = vunpack.c.l.b16 %v230
    %v270 = vunpack.c.l.b16 %v231
    %v271 = vunpack.c.l.b16 %v232
    %v272 = vunpack.c.l.b16 %v233
    %v273 = vunpack.c.l.b16 %v234
    %v274 = vunpack.c.l.b16 %v235
    %v275 = vpack.c.b16 %v260, %v259
    %v276 = vpack.c.b16 %v262, %v261
    %v277 = vpack.c.b16 %v264, %v263
    %v278 = vpack.c.b16 %v266, %v265
    %v279 = vpack.c.b16 %v268, %v267
    %v280 = vpack.c.b16 %v270, %v269
    %v281 = vpack.c.b16 %v272, %v271
    %v282 = vpack.c.b16 %v274, %v273
    %291 = vmatprep.subr.bf16.mxu0 0
    %292 = vmatpush1.bf16.msra.mxu0 %v275
    %293 = vmatprep.subr.bf16.mxu0 0
    %294 = vmatpush1.bf16.msra.mxu0 %v276
    %295 = vmatprep.subr.bf16.mxu0 0
    %296 = vmatpush1.bf16.msra.mxu0 %v277
    %297 = vmatprep.subr.bf16.mxu0 0
    %298 = vmatpush1.bf16.msra.mxu0 %v278
    %299 = vmatprep.subr.bf16.mxu0 0
    %300 = vmatpush1.bf16.msra.mxu0 %v279
    %301 = vmatprep.subr.bf16.mxu0 0
    %302 = vmatpush1.bf16.msra.mxu0 %v280
    %303 = vmatprep.subr.bf16.mxu0 0
    %304 = vmatpush1.bf16.msra.mxu0 %v281
    %305 = vmatprep.subr.bf16.mxu0 0
    %306 = vmatpush1.bf16.msra.mxu0 %v282
    %307 = vmatprep.subr.bf16.mxu0 0
    %308 = vmatpush1.bf16.msra.mxu0 0
    %309 = vmatprep.subr.bf16.mxu0 0
    %310 = vmatpush1.bf16.msra.mxu0 0
    %311 = vmatprep.subr.bf16.mxu0 0
    %312 = vmatpush1.bf16.msra.mxu0 0
    %313 = vmatprep.subr.bf16.mxu0 0
    %314 = vmatpush1.bf16.msra.mxu0 0
    %315 = vmatprep.subr.bf16.mxu0 0
    %316 = vmatpush1.bf16.msra.mxu0 0
    %317 = vmatprep.subr.bf16.mxu0 0
    %318 = vmatpush1.bf16.msra.mxu0 0
    %319 = vmatprep.subr.bf16.mxu0 0
    %320 = vmatpush1.bf16.msra.mxu0 0
    %321 = vmatprep.subr.bf16.mxu0 0
    %322 = vmatpush1.bf16.msra.mxu0 0
    %323 = vmatprep.mubr.bf16.mxu0 0
    %324 = vmatmul.mubr.bf16.gmra.mrb[0].mxu0 %v219
    %v325 = vpop.f32.mrb[0].mxu0
    %v326 = vadd.f32 %v241, %v325
    %v327 = vpop.f32.mrb[0].mxu0
    %v328 = vpop.f32.mrb[0].mxu0
    %v329 = vpop.f32.mrb[0].mxu0
    %330 = vdwg.mxu0
    %vm331 = vcmask 15360
    %332 = vst.msk [vmem:[%s7] sm:$0xff] %vm331, %v326
    // Predicated region
    $region38: #{qnet_forward.1} parent=1 // pred_check
      _
    $region39: #{qnet_forward.1} parent=1 // pred_check_branch
      %334 = sbr.rel (0) target = $region41
    $region40: #{qnet_forward.1} parent=1 // pred_region
      _
    $region41: #{qnet_forward.1} parent=1 // pred_fallthru
      _
    // Predicated region
    $region42: #{qnet_forward.1} parent=1 // pred_check
      _
    $region43: #{qnet_forward.1} parent=1 // pred_check_branch
      %336 = sbr.rel (0) target = $region45
    $region44: #{qnet_forward.1} parent=1 // pred_region
      _
    $region45: #{qnet_forward.1} parent=1 // pred_fallthru
      _
    %337 = vsyncpa [#allocation3], 1
    %338 = vsyncpa [#allocation5], 1

</llo_original>
